<compile_context>
chip_gen: v7x
topology: tpu7x:2x2x1
jax: 0.10.0
libtpu: 0.0.40
codegen_flags: <defaults>
</compile_context>

<pallas_src>
import functools

import jax
import jax.numpy as jnp
from jax import lax
from jax.experimental import pallas as pl
from jax.experimental.pallas import tpu as pltpu

BN_EPS = 1e-5


def _mlp_body(x, w1, b1, w2, b2, w3, b3, w4, b4_scalar, matmul_dtype):
    """Shared MLP math.  x is a batch-major (tile_b, S) block straight from HBM.
    Returns the lane-resident value row (1, tile_b) in f32."""

    def mm(a, b, dn):
        # MXU matmul; optionally bf16 operands with f32 accumulation.
        return lax.dot_general(a.astype(matmul_dtype), b.astype(matmul_dtype),
                               dimension_numbers=dn,
                               preferred_element_type=jnp.float32)

    contract_s = (((1,), (1,)), ((), ()))      # (H,S) x (tile_b,S) -> (H,tile_b)
    contract_k = (((1,), (0,)), ((), ()))      # (H,H) x (H,tile_b) -> (H,tile_b)

    # Layer 1 contracts over S directly on the batch-major tile; the rest of
    # the network runs lane-major: features on sublanes, batch on lanes.
    h = jnp.maximum(mm(w1, x, contract_s) + b1, 0.0)
    h = jnp.maximum(mm(w2, h, contract_k) + b2, 0.0)
    h = jnp.maximum(mm(w3, h, contract_k) + b3, 0.0)

    # Final Linear(hidden, 1): VPU multiply + cross-sublane (XLU) reduction
    # instead of a degenerate N=1 MXU matmul.  Kept in f32.
    return jnp.sum(h * w4, axis=0, keepdims=True) + b4_scalar    # (1, tile_b)


def _fused_kernel(x_ref, w1_ref, b1_ref, w2_ref, b2_ref, w3_ref, b3_ref,
                  w4_ref, b4_ref, gamma_ref, beta_ref, out_ref, *, matmul_dtype):
    """Single-launch path (B <= block_b): MLP + full-batch BatchNorm fused."""
    v = _mlp_body(x_ref[...], w1_ref[...], b1_ref[...], w2_ref[...], b2_ref[...],
                  w3_ref[...], b3_ref[...], w4_ref[...], b4_ref[0, 0],
                  matmul_dtype)                                   # (1, B)
    n = v.shape[1]
    inv_n = 1.0 / float(n)
    mean = jnp.sum(v, axis=1, keepdims=True) * inv_n
    diff = v - mean
    var = jnp.sum(diff * diff, axis=1, keepdims=True) * inv_n
    scale = gamma_ref[0, 0] * lax.rsqrt(var + BN_EPS)             # (1, 1)
    shift = beta_ref[0, 0] - mean * scale
    out_ref[...] = v * scale + shift
    # TODO(synk): BatchNorm1d running_mean / running_var momentum updates
    # (PyTorch training-time bookkeeping) are not produced by this kernel.


def _mlp_kernel(x_ref, w1_ref, b1_ref, w2_ref, b2_ref, w3_ref, b3_ref,
                w4_ref, b4_ref, v_ref, *, n_valid, matmul_dtype):
    """Pass 1 of the multi-tile path: per-batch-tile MLP, batch-major input."""
    tile_b = x_ref.shape[0]
    row = (jax.lax.broadcasted_iota(jnp.int32, (tile_b, 1), 0)
           + pl.program_id(0) * tile_b)
    # Zero ragged-tail rows so the padded lanes of v stay finite.
    x = jnp.where(row < n_valid, x_ref[...], 0.0)
    v_ref[...] = _mlp_body(x, w1_ref[...], b1_ref[...], w2_ref[...], b2_ref[...],
                           w3_ref[...], b3_ref[...], w4_ref[...], b4_ref[0, 0],
                           matmul_dtype)


def _bn_kernel(v_ref, gamma_ref, beta_ref, out_ref, *, n_valid):
    """Pass 2: BatchNorm1d(1), training mode, full-batch statistics over the
    lane-resident value row; affine folded into a single scale/shift FMA."""
    v = v_ref[...]                                                # (1, b_pad)
    lane = jax.lax.broadcasted_iota(jnp.int32, v.shape, 1)
    valid = lane < n_valid                                        # mask padding
    inv_n = 1.0 / float(n_valid)
    mean = jnp.sum(jnp.where(valid, v, 0.0), axis=1, keepdims=True) * inv_n
    diff = v - mean
    var = jnp.sum(jnp.where(valid, diff * diff, 0.0), axis=1, keepdims=True) * inv_n
    scale = gamma_ref[0, 0] * lax.rsqrt(var + BN_EPS)
    shift = beta_ref[0, 0] - mean * scale
    out_ref[...] = v * scale + shift


def critic_forward(state, params, *, block_b=4096, matmul_dtype=jnp.float32):
    """state: (B, n_states) float32.  Returns (B, 1) float32."""
    B, S = state.shape
    w1, b1, w2, b2, w3, b3, w4, b4, gamma, beta = params
    H = w1.shape[0]

    weight_bytes = 4 * (H * S + 2 * H * H + 4 * H + 3)
    mlp_flops = 2 * B * (S * H + 2 * H * H + H)

    if B <= block_b:
        # -------- fused single-kernel path (common critic batch sizes) ------
        est = 4 * (B * S + 4 * H * B + B) + 2 * weight_bytes
        vmem_limit = int(min(max(2 * est, 16 * 1024 * 1024), 48 * 1024 * 1024))
        out_row = pl.pallas_call(
            functools.partial(_fused_kernel, matmul_dtype=matmul_dtype),
            out_shape=jax.ShapeDtypeStruct((1, B), jnp.float32),
            in_specs=[
                pl.BlockSpec(memory_space=pltpu.VMEM),   # state (B,S), no transpose/pad
                pl.BlockSpec(memory_space=pltpu.VMEM),   # W1
                pl.BlockSpec(memory_space=pltpu.VMEM),   # b1
                pl.BlockSpec(memory_space=pltpu.VMEM),   # W2
                pl.BlockSpec(memory_space=pltpu.VMEM),   # b2
                pl.BlockSpec(memory_space=pltpu.VMEM),   # W3
                pl.BlockSpec(memory_space=pltpu.VMEM),   # b3
                pl.BlockSpec(memory_space=pltpu.VMEM),   # W4 (H,1)
                pl.BlockSpec(memory_space=pltpu.SMEM),   # b4 scalar
                pl.BlockSpec(memory_space=pltpu.SMEM),   # gamma scalar
                pl.BlockSpec(memory_space=pltpu.SMEM),   # beta scalar
            ],
            out_specs=pl.BlockSpec(memory_space=pltpu.VMEM),
            compiler_params=pltpu.CompilerParams(vmem_limit_bytes=vmem_limit),
            cost_estimate=pl.CostEstimate(
                flops=mlp_flops + 8 * B, transcendentals=1,
                bytes_accessed=B * S * 4 + B * 4 + weight_bytes),
        )(state, w1, b1, w2, b2, w3, b3, w4, b4, gamma, beta)
        return out_row.T                                          # (B, 1)

    # -------- multi-tile two-pass path (B > block_b) -------------------------
    tile_b = block_b
    num_tiles = pl.cdiv(B, tile_b)
    b_pad = num_tiles * tile_b

    const = lambda i: (0, 0)        # weights stay resident across all grid steps
    # TODO(synk): on v7x with large H, single-buffer the constant-index weight
    # specs (pipeline_mode=pl.Buffered(1)) and consider CORE_PARALLEL on the
    # batch-tile axis; irrelevant at H=32.

    # Scoped-VMEM estimate: double-buffered x/out tiles + weights + ~3
    # (H, tile_b) f32 intermediates, 2x headroom, capped for v7x's 64 MiB.
    est = 4 * (2 * tile_b * S + 2 * tile_b + 4 * H * tile_b) + 2 * weight_bytes
    vmem_limit = int(min(max(2 * est, 16 * 1024 * 1024), 48 * 1024 * 1024))

    # Pass 1: MLP over batch-major tiles -> lane-dense value row (1, b_pad).
    v = pl.pallas_call(
        functools.partial(_mlp_kernel, n_valid=B, matmul_dtype=matmul_dtype),
        out_shape=jax.ShapeDtypeStruct((1, b_pad), jnp.float32),
        grid=(num_tiles,),
        in_specs=[
            pl.BlockSpec((tile_b, S), lambda i: (i, 0)),          # state tile (B-major)
            pl.BlockSpec((H, S), const), pl.BlockSpec((H, 1), const),  # W1, b1
            pl.BlockSpec((H, H), const), pl.BlockSpec((H, 1), const),  # W2, b2
            pl.BlockSpec((H, H), const), pl.BlockSpec((H, 1), const),  # W3, b3
            pl.BlockSpec((H, 1), const),                          # W4 (as column)
            pl.BlockSpec(memory_space=pltpu.SMEM),                # b4 scalar
        ],
        out_specs=pl.BlockSpec((1, tile_b), lambda i: (0, i)),
        compiler_params=pltpu.CompilerParams(
            dimension_semantics=("parallel",),
            vmem_limit_bytes=vmem_limit),
        cost_estimate=pl.CostEstimate(
            flops=mlp_flops, transcendentals=0,
            bytes_accessed=B * S * 4 + b_pad * 4 + weight_bytes),
    )(state, w1, b1, w2, b2, w3, b3, w4, b4)

    # Pass 2: BatchNorm over the FULL batch (tiny, single block).
    out_row = pl.pallas_call(
        functools.partial(_bn_kernel, n_valid=B),
        out_shape=jax.ShapeDtypeStruct((1, b_pad), jnp.float32),
        in_specs=[
            pl.BlockSpec(memory_space=pltpu.VMEM),                # value row
            pl.BlockSpec(memory_space=pltpu.SMEM),                # gamma scalar
            pl.BlockSpec(memory_space=pltpu.SMEM),                # beta scalar
        ],
        out_specs=pl.BlockSpec(memory_space=pltpu.VMEM),
        cost_estimate=pl.CostEstimate(
            flops=8 * b_pad, transcendentals=1, bytes_accessed=2 * b_pad * 4),
    )(v, gamma, beta)

    return out_row[:, :B].T                                       # (B, 1)


def init_params(key, n_states, hidden_dim):
    """PyTorch-style init (uniform +-1/sqrt(fan_in)); Linear weights kept in
    PyTorch's (out_features, in_features) orientation."""
    ks = jax.random.split(key, 8)

    def linear(kw, kb, fan_in, fan_out):
        bound = 1.0 / jnp.sqrt(jnp.float32(fan_in))
        w = jax.random.uniform(kw, (fan_out, fan_in), jnp.float32, -bound, bound)
        b = jax.random.uniform(kb, (fan_out, 1), jnp.float32, -bound, bound)
        return w, b

    w1, b1 = linear(ks[0], ks[1], n_states, hidden_dim)
    w2, b2 = linear(ks[2], ks[3], hidden_dim, hidden_dim)
    w3, b3 = linear(ks[4], ks[5], hidden_dim, hidden_dim)
    w4_row, b4 = linear(ks[6], ks[7], hidden_dim, 1)              # (1, H), (1, 1)
    w4 = w4_row.T                                                 # stored as (H, 1)
    b4 = b4.reshape(1, 1)
    gamma = jnp.ones((1, 1), jnp.float32)                         # BatchNorm1d weight
    beta = jnp.zeros((1, 1), jnp.float32)                         # BatchNorm1d bias
    return (w1, b1, w2, b2, w3, b3, w4, b4, gamma, beta)


def critic_reference(state, params):
    """Plain-JAX reference for verification (f32)."""
    w1, b1, w2, b2, w3, b3, w4, b4, gamma, beta = params
    h = jnp.maximum(state @ w1.T + b1.T, 0.0)
    h = jnp.maximum(h @ w2.T + b2.T, 0.0)
    h = jnp.maximum(h @ w3.T + b3.T, 0.0)
    v = h @ w4 + b4
    mean = jnp.mean(v, axis=0, keepdims=True)
    var = jnp.mean((v - mean) ** 2, axis=0, keepdims=True)
    return (v - mean) / jnp.sqrt(var + BN_EPS) * gamma + beta


if __name__ == "__main__":
    n_states, hidden_dim = 16, 32
    key = jax.random.PRNGKey(0)
    k_params, k_state = jax.random.split(key)
    params = init_params(k_params, n_states, hidden_dim)

    # 1) Small batch -> fused single-kernel path, f32 matmuls (1e-4 parity).
    batch = 8
    state = jax.random.normal(k_state, (batch, n_states), jnp.float32)
    out = jax.block_until_ready(critic_forward(state, params))
    ref = critic_reference(state, params)
    assert out.shape == (batch, 1)
    assert jnp.allclose(out, ref, atol=1e-4, rtol=1e-4), "fused f32 mismatch"

    # 2) Same path with bf16 MXU operands (f32 accumulation) -- loose parity.
    out_bf16 = jax.block_until_ready(
        critic_forward(state, params, matmul_dtype=jnp.bfloat16))
    assert out_bf16.shape == (batch, 1)
    assert bool(jnp.all(jnp.isfinite(out_bf16)))
    assert float(jnp.max(jnp.abs(out_bf16 - ref))) < 0.15, "bf16 path drifted"

    # 3) Ragged multi-tile two-pass path (block_b forced small to exercise it).
    batch2 = 300
    state2 = jax.random.normal(jax.random.PRNGKey(1), (batch2, n_states),
                               jnp.float32)
    out2 = jax.block_until_ready(critic_forward(state2, params, block_b=128))
    ref2 = critic_reference(state2, params)
    assert out2.shape == (batch2, 1)
    assert jnp.allclose(out2, ref2, atol=1e-4, rtol=1e-4), "two-pass mismatch"

    print("KERNEL_OK")
</pallas_src>

<mosaic_0001>
module attributes {stable_mosaic.version = 11 : i64} {
  func.func @_fused_kernel(%arg0: memref<8x16xf32, #tpu.memory_space<vmem>>, %arg1: memref<32x16xf32, #tpu.memory_space<vmem>>, %arg2: memref<32x1xf32, #tpu.memory_space<vmem>>, %arg3: memref<32x32xf32, #tpu.memory_space<vmem>>, %arg4: memref<32x1xf32, #tpu.memory_space<vmem>>, %arg5: memref<32x32xf32, #tpu.memory_space<vmem>>, %arg6: memref<32x1xf32, #tpu.memory_space<vmem>>, %arg7: memref<32x1xf32, #tpu.memory_space<vmem>>, %arg8: memref<1x1xf32, #tpu.memory_space<smem>>, %arg9: memref<1x1xf32, #tpu.memory_space<smem>>, %arg10: memref<1x1xf32, #tpu.memory_space<smem>>, %arg11: memref<1x8xf32, #tpu.memory_space<vmem>>) attributes {dimension_semantics = [], scalar_prefetch = 0 : i64, scratch_operands = 0 : i64, tpu.core_type = #tpu.core_type<tc>} {
    %c0 = arith.constant 0 : index
    %c0_0 = arith.constant 0 : index
    %0 = vector.load %arg0[%c0, %c0_0] : memref<8x16xf32, #tpu.memory_space<vmem>>, vector<8x16xf32>
    %c0_1 = arith.constant 0 : index
    %c0_2 = arith.constant 0 : index
    %1 = vector.load %arg1[%c0_1, %c0_2] : memref<32x16xf32, #tpu.memory_space<vmem>>, vector<32x16xf32>
    %c0_3 = arith.constant 0 : index
    %c0_4 = arith.constant 0 : index
    %2 = vector.load %arg2[%c0_3, %c0_4] : memref<32x1xf32, #tpu.memory_space<vmem>>, vector<32x1xf32>
    %c0_5 = arith.constant 0 : index
    %c0_6 = arith.constant 0 : index
    %3 = vector.load %arg3[%c0_5, %c0_6] : memref<32x32xf32, #tpu.memory_space<vmem>>, vector<32x32xf32>
    %c0_7 = arith.constant 0 : index
    %c0_8 = arith.constant 0 : index
    %4 = vector.load %arg4[%c0_7, %c0_8] : memref<32x1xf32, #tpu.memory_space<vmem>>, vector<32x1xf32>
    %c0_9 = arith.constant 0 : index
    %c0_10 = arith.constant 0 : index
    %5 = vector.load %arg5[%c0_9, %c0_10] : memref<32x32xf32, #tpu.memory_space<vmem>>, vector<32x32xf32>
    %c0_11 = arith.constant 0 : index
    %c0_12 = arith.constant 0 : index
    %6 = vector.load %arg6[%c0_11, %c0_12] : memref<32x1xf32, #tpu.memory_space<vmem>>, vector<32x1xf32>
    %c0_13 = arith.constant 0 : index
    %c0_14 = arith.constant 0 : index
    %7 = vector.load %arg7[%c0_13, %c0_14] : memref<32x1xf32, #tpu.memory_space<vmem>>, vector<32x1xf32>
    %c0_15 = arith.constant 0 : index
    %c0_16 = arith.constant 0 : index
    %8 = memref.load %arg8[%c0_15, %c0_16] : memref<1x1xf32, #tpu.memory_space<smem>>
    %cst = arith.constant dense<0.000000e+00> : vector<32x8xf32>
    %9 = tpu.matmul %1, %0, %cst {dimension_numbers = #tpu.dot_dimension_numbers<[1], [1], [0], [0], [0, 0, 1, 0], [], []>} : vector<32x16xf32>, vector<8x16xf32>, vector<32x8xf32> -> vector<32x8xf32>
    %10 = vector.broadcast %2 : vector<32x1xf32> to vector<32x8xf32>
    %11 = arith.addf %9, %10 : vector<32x8xf32>
    %cst_17 = arith.constant 0.000000e+00 : f32
    %12 = vector.broadcast %cst_17 : f32 to vector<32x8xf32>
    %13 = arith.maximumf %11, %12 : vector<32x8xf32>
    %cst_18 = arith.constant dense<0.000000e+00> : vector<32x8xf32>
    %14 = tpu.matmul %3, %13, %cst_18 {dimension_numbers = #tpu.dot_dimension_numbers<[1], [0], [0], [1], [0, 0, 1, 1], [], []>} : vector<32x32xf32>, vector<32x8xf32>, vector<32x8xf32> -> vector<32x8xf32>
    %15 = vector.broadcast %4 : vector<32x1xf32> to vector<32x8xf32>
    %16 = arith.addf %14, %15 : vector<32x8xf32>
    %cst_19 = arith.constant 0.000000e+00 : f32
    %17 = vector.broadcast %cst_19 : f32 to vector<32x8xf32>
    %18 = arith.maximumf %16, %17 : vector<32x8xf32>
    %cst_20 = arith.constant dense<0.000000e+00> : vector<32x8xf32>
    %19 = tpu.matmul %5, %18, %cst_20 {dimension_numbers = #tpu.dot_dimension_numbers<[1], [0], [0], [1], [0, 0, 1, 1], [], []>} : vector<32x32xf32>, vector<32x8xf32>, vector<32x8xf32> -> vector<32x8xf32>
    %20 = vector.broadcast %6 : vector<32x1xf32> to vector<32x8xf32>
    %21 = arith.addf %19, %20 : vector<32x8xf32>
    %cst_21 = arith.constant 0.000000e+00 : f32
    %22 = vector.broadcast %cst_21 : f32 to vector<32x8xf32>
    %23 = arith.maximumf %21, %22 : vector<32x8xf32>
    %24 = vector.broadcast %7 : vector<32x1xf32> to vector<32x8xf32>
    %25 = arith.mulf %23, %24 : vector<32x8xf32>
    %cst_22 = arith.constant dense<0.000000e+00> : vector<8xf32>
    %26 = vector.multi_reduction <add>, %25, %cst_22 [0] : vector<32x8xf32> to vector<8xf32>
    %27 = vector.shape_cast %26 : vector<8xf32> to vector<1x8xf32>
    %28 = vector.broadcast %8 : f32 to vector<1x8xf32>
    %29 = arith.addf %27, %28 : vector<1x8xf32>
    %cst_23 = arith.constant dense<0.000000e+00> : vector<1xf32>
    %30 = vector.multi_reduction <add>, %29, %cst_23 [1] : vector<1x8xf32> to vector<1xf32>
    %31 = vector.shape_cast %30 : vector<1xf32> to vector<1x1xf32>
    %cst_24 = arith.constant 1.250000e-01 : f32
    %32 = vector.broadcast %cst_24 : f32 to vector<1x1xf32>
    %33 = arith.mulf %31, %32 : vector<1x1xf32>
    %34 = vector.broadcast %33 : vector<1x1xf32> to vector<1x8xf32>
    %35 = arith.subf %29, %34 : vector<1x8xf32>
    %36 = arith.mulf %35, %35 : vector<1x8xf32>
    %cst_25 = arith.constant dense<0.000000e+00> : vector<1xf32>
    %37 = vector.multi_reduction <add>, %36, %cst_25 [1] : vector<1x8xf32> to vector<1xf32>
    %38 = vector.shape_cast %37 : vector<1xf32> to vector<1x1xf32>
    %cst_26 = arith.constant 1.250000e-01 : f32
    %39 = vector.broadcast %cst_26 : f32 to vector<1x1xf32>
    %40 = arith.mulf %38, %39 : vector<1x1xf32>
    %c0_27 = arith.constant 0 : index
    %c0_28 = arith.constant 0 : index
    %41 = memref.load %arg9[%c0_27, %c0_28] : memref<1x1xf32, #tpu.memory_space<smem>>
    %cst_29 = arith.constant 9.99999974E-6 : f32
    %42 = vector.broadcast %cst_29 : f32 to vector<1x1xf32>
    %43 = arith.addf %40, %42 : vector<1x1xf32>
    %44 = math.rsqrt %43 : vector<1x1xf32>
    %45 = vector.broadcast %41 : f32 to vector<1x1xf32>
    %46 = arith.mulf %45, %44 : vector<1x1xf32>
    %c0_30 = arith.constant 0 : index
    %c0_31 = arith.constant 0 : index
    %47 = memref.load %arg10[%c0_30, %c0_31] : memref<1x1xf32, #tpu.memory_space<smem>>
    %48 = arith.mulf %33, %46 : vector<1x1xf32>
    %49 = vector.broadcast %47 : f32 to vector<1x1xf32>
    %50 = arith.subf %49, %48 : vector<1x1xf32>
    %51 = vector.broadcast %46 : vector<1x1xf32> to vector<1x8xf32>
    %52 = arith.mulf %29, %51 : vector<1x8xf32>
    %53 = vector.broadcast %50 : vector<1x1xf32> to vector<1x8xf32>
    %54 = arith.addf %52, %53 : vector<1x8xf32>
    %c0_32 = arith.constant 0 : index
    %c0_33 = arith.constant 0 : index
    %55 = vector.load %arg11[%c0_32, %c0_33] : memref<1x8xf32, #tpu.memory_space<vmem>>, vector<1x8xf32>
    tpu.vector_store %arg11[%c0_32, %c0_33], %54 {strides = array<i32>} : memref<1x8xf32, #tpu.memory_space<vmem>>, vector<1x8xf32>,
    return
  }
}

</mosaic_0001>

<llo_original>
// kernel: tpu_custom_call.1
$region0: #{tpu_custom_call.1}
  #allocation0 [shape = 'u32[]', space=smem, size = 0x4, offset = 0x4, fixed_abs, tag = 'smem constant byte address 0x4 - core index']
  #allocation1 [shape = 'u32[144,128]{1,0:T(1,128)}', space=vmem, size = 0x12000, scoped, tag = 'internal scratch']
  #allocation2 [shape = 'f32[1,1]{1,0:T(1,128)S(6)}', space=smem, size = 0x200, scoped, tag = 'scoped memory for tpu_custom_call.1']
  #allocation3 [shape = 'f32[1,1]{1,0:T(1,128)S(6)}', space=smem, size = 0x200, scoped, tag = 'scoped memory for tpu_custom_call.1']
  #allocation4 [shape = 'f32[1,1]{1,0:T(1,128)S(6)}', space=smem, size = 0x200, scoped, tag = 'scoped memory for tpu_custom_call.1']
  %s0 = inlined_call_operand.vmem [shape: f32[8,16], index: 0, kind: input, shape index: {}]
  %s1 = inlined_call_operand.vmem [shape: f32[32,16], index: 1, kind: input, shape index: {}]
  %s2 = inlined_call_operand.vmem [shape: f32[32,1], index: 2, kind: input, shape index: {}]
  %s3 = inlined_call_operand.vmem [shape: f32[32,32], index: 3, kind: input, shape index: {}]
  %s4 = inlined_call_operand.vmem [shape: f32[32,1], index: 4, kind: input, shape index: {}]
  %s5 = inlined_call_operand.vmem [shape: f32[32,32], index: 5, kind: input, shape index: {}]
  %s6 = inlined_call_operand.vmem [shape: f32[32,1], index: 6, kind: input, shape index: {}]
  %s7 = inlined_call_operand.vmem [shape: f32[32,1], index: 7, kind: input, shape index: {}]
  %s8 = inlined_call_operand.<no memory space> [shape: f32[1,1], index: 8, kind: input, shape index: {}]
  %s9 = inlined_call_operand.<no memory space> [shape: f32[1,1], index: 9, kind: input, shape index: {}]
  %s10 = inlined_call_operand.<no memory space> [shape: f32[1,1], index: 10, kind: input, shape index: {}]
  %s11 = inlined_call_operand.hbm [shape: f32[1,8], index: 11, kind: output, shape index: {}]
  %s12 = sld [smem:[#allocation0]]
  $region54: #{tpu_custom_call.1} parent=0
    _
  %s14 = ssub.s32 1, %s12
  %s15 = scalar_select 0, %s14, %s12
  %16 = sst [smem:[#allocation2]] %s8
  %17 = sst [smem:[#allocation3]] %s9
  %18 = sst [smem:[#allocation4]] %s10
  $region1: #{tpu_custom_call.1} parent=0
    #allocation5 [shape = 'u8[512]{0}', space=vmem, size = 0x400, scoped, tag = 'output window, operand 0, single buffered']
    #allocation6 [shape = 's32[1]{0}', space=sflag, size = 0x4, scoped, tag = 'scoped memory for tpu_custom_call.1']
    %19 = vsyncpa [#allocation6], 0
    // Predicated region
    $region2: #{tpu_custom_call.1} parent=1 // pred_check
      _
    $region3: #{tpu_custom_call.1} parent=1 // pred_check_branch
      %21 = sbr.rel (0) target = $region5
    $region4: #{tpu_custom_call.1} parent=1 // pred_region
      _
    $region5: #{tpu_custom_call.1} parent=1 // pred_fallthru
      _
    // Predicated region
    $region6: #{tpu_custom_call.1} parent=1 // pred_check
      _
    $region7: #{tpu_custom_call.1} parent=1 // pred_check_branch
      %23 = sbr.rel (0) target = $region9
    $region8: #{tpu_custom_call.1} parent=1 // pred_region
      _
    $region9: #{tpu_custom_call.1} parent=1 // pred_fallthru
      _
    // Predicated region
    $region10: #{tpu_custom_call.1} parent=1 // pred_check
      _
    $region11: #{tpu_custom_call.1} parent=1 // pred_check_branch
      %25 = sbr.rel (0) target = $region13
    $region12: #{tpu_custom_call.1} parent=1 // pred_region
      _
    $region13: #{tpu_custom_call.1} parent=1 // pred_fallthru
      _
    // Predicated region
    $region14: #{tpu_custom_call.1} parent=1 // pred_check
      _
    $region15: #{tpu_custom_call.1} parent=1 // pred_check_branch
      %27 = sbr.rel (0) target = $region17
    $region16: #{tpu_custom_call.1} parent=1 // pred_region
      _
    $region17: #{tpu_custom_call.1} parent=1 // pred_fallthru
      _
    // Predicated region
    $region18: #{tpu_custom_call.1} parent=1 // pred_check
      _
    $region19: #{tpu_custom_call.1} parent=1 // pred_check_branch
      %29 = sbr.rel (0) target = $region21
    $region20: #{tpu_custom_call.1} parent=1 // pred_region
      _
    $region21: #{tpu_custom_call.1} parent=1 // pred_fallthru
      _
    // Predicated region
    $region22: #{tpu_custom_call.1} parent=1 // pred_check
      _
    $region23: #{tpu_custom_call.1} parent=1 // pred_check_branch
      %31 = sbr.rel (0) target = $region25
    $region24: #{tpu_custom_call.1} parent=1 // pred_region
      _
    $region25: #{tpu_custom_call.1} parent=1 // pred_fallthru
      _
    // Predicated region
    $region26: #{tpu_custom_call.1} parent=1 // pred_check
      _
    $region27: #{tpu_custom_call.1} parent=1 // pred_check_branch
      %33 = sbr.rel (0) target = $region29
    $region28: #{tpu_custom_call.1} parent=1 // pred_region
      _
    $region29: #{tpu_custom_call.1} parent=1 // pred_fallthru
      _
    // Predicated region
    $region30: #{tpu_custom_call.1} parent=1 // pred_check
      _
    $region31: #{tpu_custom_call.1} parent=1 // pred_check_branch
      %35 = sbr.rel (0) target = $region33
    $region32: #{tpu_custom_call.1} parent=1 // pred_region
      _
    $region33: #{tpu_custom_call.1} parent=1 // pred_fallthru
      _
    // Predicated region
    $region34: #{tpu_custom_call.1} parent=1 // pred_check
      _
    $region35: #{tpu_custom_call.1} parent=1 // pred_check_branch
      %37 = sbr.rel (0) target = $region37
    $region36: #{tpu_custom_call.1} parent=1 // pred_region
      _
    $region37: #{tpu_custom_call.1} parent=1 // pred_fallthru
      _
    // Predicated region
    $region38: #{tpu_custom_call.1} parent=1 // pred_check
      _
    $region39: #{tpu_custom_call.1} parent=1 // pred_check_branch
      %39 = sbr.rel (0) target = $region41
    $region40: #{tpu_custom_call.1} parent=1 // pred_region
      _
    $region41: #{tpu_custom_call.1} parent=1 // pred_fallthru
      _
    // Predicated region
    $region42: #{tpu_custom_call.1} parent=1 // pred_check
      _
    $region43: #{tpu_custom_call.1} parent=1 // pred_check_branch
      %41 = sbr.rel (0) target = $region45
    $region44: #{tpu_custom_call.1} parent=1 // pred_region
      _
    $region45: #{tpu_custom_call.1} parent=1 // pred_fallthru
      _
    %v42 = vld [vmem:[%s0] sm:$0xff]
    %v43 = vld [vmem:[%s1] sm:$0xff]
    %v44 = vld [vmem:[%s1 + $0x8] sm:$0xff]
    %v45 = vld [vmem:[%s1 + $0x10] sm:$0xff]
    %v46 = vld [vmem:[%s1 + $0x18] sm:$0xff]
    %v47 = vld [vmem:[%s2] sm:$0xff]
    %v48 = vld [vmem:[%s2 + $0x8] sm:$0xff]
    %v49 = vld [vmem:[%s2 + $0x10] sm:$0xff]
    %v50 = vld [vmem:[%s2 + $0x18] sm:$0xff]
    %v51 = vld [vmem:[%s3] sm:$0xff]
    %v52 = vld [vmem:[%s3 + $0x8] sm:$0xff]
    %v53 = vld [vmem:[%s3 + $0x10] sm:$0xff]
    %v54 = vld [vmem:[%s3 + $0x18] sm:$0xff]
    %v55 = vld [vmem:[%s4] sm:$0xff]
    %v56 = vld [vmem:[%s4 + $0x8] sm:$0xff]
    %v57 = vld [vmem:[%s4 + $0x10] sm:$0xff]
    %v58 = vld [vmem:[%s4 + $0x18] sm:$0xff]
    %v59 = vld [vmem:[%s5] sm:$0xff]
    %v60 = vld [vmem:[%s5 + $0x8] sm:$0xff]
    %v61 = vld [vmem:[%s5 + $0x10] sm:$0xff]
    %v62 = vld [vmem:[%s5 + $0x18] sm:$0xff]
    %v63 = vld [vmem:[%s6] sm:$0xff]
    %v64 = vld [vmem:[%s6 + $0x8] sm:$0xff]
    %v65 = vld [vmem:[%s6 + $0x10] sm:$0xff]
    %v66 = vld [vmem:[%s6 + $0x18] sm:$0xff]
    %v67 = vld [vmem:[%s7] sm:$0xff]
    %v68 = vld [vmem:[%s7 + $0x8] sm:$0xff]
    %v69 = vld [vmem:[%s7 + $0x10] sm:$0xff]
    %v70 = vld [vmem:[%s7 + $0x18] sm:$0xff]
    %s71 = sld [smem:[#allocation2]]
    %73 = vset.pattern.permute.xlu0 0
    %74 = vperm.xlu0 %73, %v47
    %v75 = vpop.permute.xlu0 %74
    %78 = vset.pattern.permute.xlu0 0
    %79 = vperm.xlu0 %78, %v48
    %v80 = vpop.permute.xlu0 %79
    %83 = vset.pattern.permute.xlu0 0
    %84 = vperm.xlu0 %83, %v49
    %v85 = vpop.permute.xlu0 %84
    %88 = vset.pattern.permute.xlu0 0
    %89 = vperm.xlu0 %88, %v50
    %v90 = vpop.permute.xlu0 %89
    %vm92 = vcmask 130048
    %v94 = vsel %vm92, %v43, 0
    %v97 = vsel %vm92, %v44, 0
    %v100 = vsel %vm92, %v45, 0
    %v103 = vsel %vm92, %v46, 0
    %v106 = vsel %vm92, %v42, 0
    %108 = vmatprep.subr.mxu0 0.0
    %109 = vmatpush1.xpose.msra.mxu0 %v106
    %110 = vmatprep.subr.mxu0 0.0
    %111 = vmatpush1.xpose.msra.mxu0 0.0
    %112 = vmatprep.subr.mxu0 0.0
    %113 = vmatpush1.xpose.msra.mxu0 0.0
    %114 = vmatprep.subr.mxu0 0.0
    %115 = vmatpush1.xpose.msra.mxu0 0.0
    %116 = vmatprep.subr.mxu0 0.0
    %117 = vmatpush1.xpose.msra.mxu0 0.0
    %118 = vmatprep.subr.mxu0 0.0
    %119 = vmatpush1.xpose.msra.mxu0 0.0
    %120 = vmatprep.subr.mxu0 0.0
    %121 = vmatpush1.xpose.msra.mxu0 0.0
    %122 = vmatprep.subr.mxu0 0.0
    %123 = vmatpush1.xpose.msra.mxu0 0.0
    %124 = vmatprep.subr.mxu0 0.0
    %125 = vmatpush1.xpose.msra.mxu0 0.0
    %126 = vmatprep.subr.mxu0 0.0
    %127 = vmatpush1.xpose.msra.mxu0 0.0
    %128 = vmatprep.subr.mxu0 0.0
    %129 = vmatpush1.xpose.msra.mxu0 0.0
    %130 = vmatprep.subr.mxu0 0.0
    %131 = vmatpush1.xpose.msra.mxu0 0.0
    %132 = vmatprep.subr.mxu0 0.0
    %133 = vmatpush1.xpose.msra.mxu0 0.0
    %134 = vmatprep.subr.mxu0 0.0
    %135 = vmatpush1.xpose.msra.mxu0 0.0
    %136 = vmatprep.subr.mxu0 0.0
    %137 = vmatpush1.xpose.msra.mxu0 0.0
    %138 = vmatprep.subr.mxu0 0.0
    %139 = vmatpush1.xpose.msra.mxu0 0.0
    %140 = vmatprep.subr.mxu0 0.0
    %141 = vmatpush1.xpose.msra.mxu0 0.0
    %142 = vmatprep.subr.mxu0 0.0
    %143 = vmatpush1.xpose.msra.mxu0 0.0
    %144 = vmatprep.subr.mxu0 0.0
    %145 = vmatpush1.xpose.msra.mxu0 0.0
    %146 = vmatprep.subr.mxu0 0.0
    %147 = vmatpush1.xpose.msra.mxu0 0.0
    %148 = vmatprep.subr.mxu0 0.0
    %149 = vmatpush1.xpose.msra.mxu0 0.0
    %150 = vmatprep.subr.mxu0 0.0
    %151 = vmatpush1.xpose.msra.mxu0 0.0
    %152 = vmatprep.subr.mxu0 0.0
    %153 = vmatpush1.xpose.msra.mxu0 0.0
    %154 = vmatprep.subr.mxu0 0.0
    %155 = vmatpush1.xpose.msra.mxu0 0.0
    %156 = vmatprep.subr.mxu0 0.0
    %157 = vmatpush1.xpose.msra.mxu0 0.0
    %158 = vmatprep.subr.mxu0 0.0
    %159 = vmatpush1.xpose.msra.mxu0 0.0
    %160 = vmatprep.subr.mxu0 0.0
    %161 = vmatpush1.xpose.msra.mxu0 0.0
    %162 = vmatprep.subr.mxu0 0.0
    %163 = vmatpush1.xpose.msra.mxu0 0.0
    %164 = vmatprep.subr.mxu0 0.0
    %165 = vmatpush1.xpose.msra.mxu0 0.0
    %166 = vmatprep.subr.mxu0 0.0
    %167 = vmatpush1.xpose.msra.mxu0 0.0
    %168 = vmatprep.subr.mxu0 0.0
    %169 = vmatpush1.xpose.msra.mxu0 0.0
    %170 = vmatprep.subr.mxu0 0.0
    %171 = vmatpush1.xpose.msra.mxu0 0.0
    %172 = vmatprep.mubr.f32.mxu0 0.0
    %173 = vmatmul.mubr.f32.gmra.mrb[0].mxu0 %v94
    %v174 = vpop.f32.mrb[0].mxu0
    %v175 = vadd.f32 %v75, %v174
    %v176 = vpop.f32.mrb[0].mxu0
    %177 = vmatprep.mubr.f32.mxu0 0.0
    %178 = vmatmul.mubr.f32.gmra.mrb[0].mxu0 %v97
    %v179 = vpop.f32.mrb[0].mxu0
    %v180 = vadd.f32 %v80, %v179
    %v181 = vpop.f32.mrb[0].mxu0
    %182 = vmatprep.mubr.f32.mxu0 0.0
    %183 = vmatmul.mubr.f32.gmra.mrb[0].mxu0 %v100
    %v184 = vpop.f32.mrb[0].mxu0
    %v185 = vadd.f32 %v85, %v184
    %v186 = vpop.f32.mrb[0].mxu0
    %187 = vmatprep.mubr.f32.mxu0 0.0
    %188 = vmatmul.mubr.f32.gmra.mrb[0].mxu0 %v103
    %v189 = vpop.f32.mrb[0].mxu0
    %v190 = vadd.f32 %v90, %v189
    %v191 = vpop.f32.mrb[0].mxu0
    %192 = vdwg.mxu0
    %v193 = vmax.f32 %v175, 0.0
    %v194 = vmax.f32 %v180, 0.0
    %v195 = vmax.f32 %v185, 0.0
    %v196 = vmax.f32 %v190, 0.0
    %198 = vset.pattern.permute.xlu0 0
    %199 = vperm.xlu0 %198, %v55
    %v200 = vpop.permute.xlu0 %199
    %203 = vset.pattern.permute.xlu0 0
    %204 = vperm.xlu0 %203, %v56
    %v205 = vpop.permute.xlu0 %204
    %208 = vset.pattern.permute.xlu0 0
    %209 = vperm.xlu0 %208, %v57
    %v210 = vpop.permute.xlu0 %209
    %213 = vset.pattern.permute.xlu0 0
    %214 = vperm.xlu0 %213, %v58
    %v215 = vpop.permute.xlu0 %214
    %vm217 = vcmask 261120
    %v219 = vsel %vm217, %v51, 0
    %v222 = vsel %vm217, %v52, 0
    %v225 = vsel %vm217, %v53, 0
    %v228 = vsel %vm217, %v54, 0
    %230 = vmatprep.subr.mxu0 0.0
    %231 = vmatpush1.msra.mxu0 %v193
    %232 = vmatprep.subr.mxu0 0.0
    %233 = vmatpush1.msra.mxu0 %v194
    %234 = vmatprep.subr.mxu0 0.0
    %235 = vmatpush1.msra.mxu0 %v195
    %236 = vmatprep.subr.mxu0 0.0
    %237 = vmatpush1.msra.mxu0 %v196
    %238 = vmatprep.subr.mxu0 0.0
    %239 = vmatpush1.msra.mxu0 0.0
    %240 = vmatprep.subr.mxu0 0.0
    %241 = vmatpush1.msra.mxu0 0.0
    %242 = vmatprep.subr.mxu0 0.0
    %243 = vmatpush1.msra.mxu0 0.0
    %244 = vmatprep.subr.mxu0 0.0
    %245 = vmatpush1.msra.mxu0 0.0
    %246 = vmatprep.subr.mxu0 0.0
    %247 = vmatpush1.msra.mxu0 0.0
    %248 = vmatprep.subr.mxu0 0.0
    %249 = vmatpush1.msra.mxu0 0.0
    %250 = vmatprep.subr.mxu0 0.0
    %251 = vmatpush1.msra.mxu0 0.0
    %252 = vmatprep.subr.mxu0 0.0
    %253 = vmatpush1.msra.mxu0 0.0
    %254 = vmatprep.subr.mxu0 0.0
    %255 = vmatpush1.msra.mxu0 0.0
    %256 = vmatprep.subr.mxu0 0.0
    %257 = vmatpush1.msra.mxu0 0.0
    %258 = vmatprep.subr.mxu0 0.0
    %259 = vmatpush1.msra.mxu0 0.0
    %260 = vmatprep.subr.mxu0 0.0
    %261 = vmatpush1.msra.mxu0 0.0
    %262 = vmatprep.subr.mxu0 0.0
    %263 = vmatpush1.msra.mxu0 0.0
    %264 = vmatprep.subr.mxu0 0.0
    %265 = vmatpush1.msra.mxu0 0.0
    %266 = vmatprep.subr.mxu0 0.0
    %267 = vmatpush1.msra.mxu0 0.0
    %268 = vmatprep.subr.mxu0 0.0
    %269 = vmatpush1.msra.mxu0 0.0
    %270 = vmatprep.subr.mxu0 0.0
    %271 = vmatpush1.msra.mxu0 0.0
    %272 = vmatprep.subr.mxu0 0.0
    %273 = vmatpush1.msra.mxu0 0.0
    %274 = vmatprep.subr.mxu0 0.0
    %275 = vmatpush1.msra.mxu0 0.0
    %276 = vmatprep.subr.mxu0 0.0
    %277 = vmatpush1.msra.mxu0 0.0
    %278 = vmatprep.subr.mxu0 0.0
    %279 = vmatpush1.msra.mxu0 0.0
    %280 = vmatprep.subr.mxu0 0.0
    %281 = vmatpush1.msra.mxu0 0.0
    %282 = vmatprep.subr.mxu0 0.0
    %283 = vmatpush1.msra.mxu0 0.0
    %284 = vmatprep.subr.mxu0 0.0
    %285 = vmatpush1.msra.mxu0 0.0
    %286 = vmatprep.subr.mxu0 0.0
    %287 = vmatpush1.msra.mxu0 0.0
    %288 = vmatprep.subr.mxu0 0.0
    %289 = vmatpush1.msra.mxu0 0.0
    %290 = vmatprep.subr.mxu0 0.0
    %291 = vmatpush1.msra.mxu0 0.0
    %292 = vmatprep.subr.mxu0 0.0
    %293 = vmatpush1.msra.mxu0 0.0
    %294 = vmatprep.mubr.f32.mxu0 0.0
    %295 = vmatmul.mubr.f32.gmra.mrb[0].mxu0 %v219
    %v296 = vpop.f32.mrb[0].mxu0
    %v297 = vadd.f32 %v200, %v296
    %v298 = vpop.f32.mrb[0].mxu0
    %299 = vmatprep.mubr.f32.mxu0 0.0
    %300 = vmatmul.mubr.f32.gmra.mrb[0].mxu0 %v222
    %v301 = vpop.f32.mrb[0].mxu0
    %v302 = vadd.f32 %v205, %v301
    %v303 = vpop.f32.mrb[0].mxu0
    %304 = vmatprep.mubr.f32.mxu0 0.0
    %305 = vmatmul.mubr.f32.gmra.mrb[0].mxu0 %v225
    %v306 = vpop.f32.mrb[0].mxu0
    %v307 = vadd.f32 %v210, %v306
    %v308 = vpop.f32.mrb[0].mxu0
    %309 = vmatprep.mubr.f32.mxu0 0.0
    %310 = vmatmul.mubr.f32.gmra.mrb[0].mxu0 %v228
    %v311 = vpop.f32.mrb[0].mxu0
    %v312 = vadd.f32 %v215, %v311
    %v313 = vpop.f32.mrb[0].mxu0
    %314 = vdwg.mxu0
    %v315 = vmax.f32 %v297, 0.0
    %v316 = vmax.f32 %v302, 0.0
    %v317 = vmax.f32 %v307, 0.0
    %v318 = vmax.f32 %v312, 0.0
    %320 = vset.pattern.permute.xlu0 0
    %321 = vperm.xlu0 %320, %v63
    %v322 = vpop.permute.xlu0 %321
    %325 = vset.pattern.permute.xlu0 0
    %326 = vperm.xlu0 %325, %v64
    %v327 = vpop.permute.xlu0 %326
    %330 = vset.pattern.permute.xlu0 0
    %331 = vperm.xlu0 %330, %v65
    %v332 = vpop.permute.xlu0 %331
    %335 = vset.pattern.permute.xlu0 0
    %336 = vperm.xlu0 %335, %v66
    %v337 = vpop.permute.xlu0 %336
    %v340 = vsel %vm217, %v59, 0
    %v343 = vsel %vm217, %v60, 0
    %v346 = vsel %vm217, %v61, 0
    %v349 = vsel %vm217, %v62, 0
    %351 = vmatprep.subr.mxu0 0.0
    %352 = vmatpush1.msra.mxu0 %v315
    %353 = vmatprep.subr.mxu0 0.0
    %354 = vmatpush1.msra.mxu0 %v316
    %355 = vmatprep.subr.mxu0 0.0
    %356 = vmatpush1.msra.mxu0 %v317
    %357 = vmatprep.subr.mxu0 0.0
    %358 = vmatpush1.msra.mxu0 %v318
    %359 = vmatprep.subr.mxu0 0.0
    %360 = vmatpush1.msra.mxu0 0.0
    %361 = vmatprep.subr.mxu0 0.0
    %362 = vmatpush1.msra.mxu0 0.0
    %363 = vmatprep.subr.mxu0 0.0
    %364 = vmatpush1.msra.mxu0 0.0
    %365 = vmatprep.subr.mxu0 0.0
    %366 = vmatpush1.msra.mxu0 0.0
    %367 = vmatprep.subr.mxu0 0.0
    %368 = vmatpush1.msra.mxu0 0.0
    %369 = vmatprep.subr.mxu0 0.0
    %370 = vmatpush1.msra.mxu0 0.0
    %371 = vmatprep.subr.mxu0 0.0
    %372 = vmatpush1.msra.mxu0 0.0
    %373 = vmatprep.subr.mxu0 0.0
    %374 = vmatpush1.msra.mxu0 0.0
    %375 = vmatprep.subr.mxu0 0.0
    %376 = vmatpush1.msra.mxu0 0.0
    %377 = vmatprep.subr.mxu0 0.0
    %378 = vmatpush1.msra.mxu0 0.0
    %379 = vmatprep.subr.mxu0 0.0
    %380 = vmatpush1.msra.mxu0 0.0
    %381 = vmatprep.subr.mxu0 0.0
    %382 = vmatpush1.msra.mxu0 0.0
    %383 = vmatprep.subr.mxu0 0.0
    %384 = vmatpush1.msra.mxu0 0.0
    %385 = vmatprep.subr.mxu0 0.0
    %386 = vmatpush1.msra.mxu0 0.0
    %387 = vmatprep.subr.mxu0 0.0
    %388 = vmatpush1.msra.mxu0 0.0
    %389 = vmatprep.subr.mxu0 0.0
    %390 = vmatpush1.msra.mxu0 0.0
    %391 = vmatprep.subr.mxu0 0.0
    %392 = vmatpush1.msra.mxu0 0.0
    %393 = vmatprep.subr.mxu0 0.0
    %394 = vmatpush1.msra.mxu0 0.0
    %395 = vmatprep.subr.mxu0 0.0
    %396 = vmatpush1.msra.mxu0 0.0
    %397 = vmatprep.subr.mxu0 0.0
    %398 = vmatpush1.msra.mxu0 0.0
    %399 = vmatprep.subr.mxu0 0.0
    %400 = vmatpush1.msra.mxu0 0.0
    %401 = vmatprep.subr.mxu0 0.0
    %402 = vmatpush1.msra.mxu0 0.0
    %403 = vmatprep.subr.mxu0 0.0
    %404 = vmatpush1.msra.mxu0 0.0
    %405 = vmatprep.subr.mxu0 0.0
    %406 = vmatpush1.msra.mxu0 0.0
    %407 = vmatprep.subr.mxu0 0.0
    %408 = vmatpush1.msra.mxu0 0.0
    %409 = vmatprep.subr.mxu0 0.0
    %410 = vmatpush1.msra.mxu0 0.0
    %411 = vmatprep.subr.mxu0 0.0
    %412 = vmatpush1.msra.mxu0 0.0
    %413 = vmatprep.subr.mxu0 0.0
    %414 = vmatpush1.msra.mxu0 0.0
    %415 = vmatprep.mubr.f32.mxu0 0.0
    %416 = vmatmul.mubr.f32.gmra.mrb[0].mxu0 %v340
    %v417 = vpop.f32.mrb[0].mxu0
    %v418 = vadd.f32 %v322, %v417
    %v419 = vpop.f32.mrb[0].mxu0
    %420 = vmatprep.mubr.f32.mxu0 0.0
    %421 = vmatmul.mubr.f32.gmra.mrb[0].mxu0 %v343
    %v422 = vpop.f32.mrb[0].mxu0
    %v423 = vadd.f32 %v327, %v422
    %v424 = vpop.f32.mrb[0].mxu0
    %425 = vmatprep.mubr.f32.mxu0 0.0
    %426 = vmatmul.mubr.f32.gmra.mrb[0].mxu0 %v346
    %v427 = vpop.f32.mrb[0].mxu0
    %v428 = vadd.f32 %v332, %v427
    %v429 = vpop.f32.mrb[0].mxu0
    %430 = vmatprep.mubr.f32.mxu0 0.0
    %431 = vmatmul.mubr.f32.gmra.mrb[0].mxu0 %v349
    %v432 = vpop.f32.mrb[0].mxu0
    %v433 = vadd.f32 %v337, %v432
    %v434 = vpop.f32.mrb[0].mxu0
    %435 = vdwg.mxu0
    %v436 = vmax.f32 %v418, 0.0
    %v437 = vmax.f32 %v423, 0.0
    %v438 = vmax.f32 %v428, 0.0
    %v439 = vmax.f32 %v433, 0.0
    %441 = vset.pattern.permute.xlu0 0
    %442 = vperm.xlu0 %441, %v67
    %v443 = vpop.permute.xlu0 %442
    %446 = vset.pattern.permute.xlu0 0
    %447 = vperm.xlu0 %446, %v68
    %v448 = vpop.permute.xlu0 %447
    %451 = vset.pattern.permute.xlu0 0
    %452 = vperm.xlu0 %451, %v69
    %v453 = vpop.permute.xlu0 %452
    %456 = vset.pattern.permute.xlu0 0
    %457 = vperm.xlu0 %456, %v70
    %v458 = vpop.permute.xlu0 %457
    %v460 = vmul.f32 %v436, %v443
    %v461 = vmul.f32 %v437, %v448
    %v462 = vmul.f32 %v438, %v453
    %v463 = vmul.f32 %v439, %v458
    %vm464 = vcmask 64512
    %v465 = vsel %vm464, %v460, 0.0
    %v466 = vsel %vm464, %v461, 0.0
    %v467 = vadd.f32 %v465, %v466
    %v468 = vsel %vm464, %v462, 0.0
    %v469 = vadd.f32 %v467, %v468
    %v470 = vsel %vm464, %v463, 0.0
    %v471 = vadd.f32 %v469, %v470
    %v472 = vrot.slane %v471, 4
    %v473 = vadd.f32 %v471, %v472
    %v474 = vrot.slane %v473, 2
    %v475 = vadd.f32 %v473, %v474
    %v476 = vrot.slane %v475, 1
    %v477 = vadd.f32 %v475, %v476
    %v478 = vstv %s71
    %v479 = vadd.f32 %v477, %v478
    %v480 = vsel %vm464, %v479, 0.0
    %481 = vadd.xlane.f32.xlu0 %v480
    %v482 = vpop.xlane.xlu0 %481
    %v483 = vmul.f32 %v482, 0.125
    %v484 = vsub.f32 %v479, %v483
    %v485 = vmul.f32 %v484, %v484
    %v486 = vsel %vm464, %v485, 0.0
    %487 = vadd.xlane.f32.xlu0 %v486
    %v488 = vpop.xlane.xlu0 %487
    %v489 = vmul.f32 %v488, 0.125
    %s490 = sld [smem:[#allocation3]]
    %v491 = vadd.f32 %v489, 1e-05
    %v492 = vrsqrt.pop %v491
    %v493 = vstv %s490
    %v494 = vmul.f32 %v493, %v492
    %s495 = sld [smem:[#allocation4]]
    %v496 = vmul.f32 %v483, %v494
    %v497 = vstv %s495
    %v498 = vsub.f32 %v497, %v496
    %v499 = vmul.f32 %v479, %v494
    %v500 = vadd.f32 %v499, %v498
    %vm501 = vcmask 57344
    %502 = vst.msk [vmem:[#allocation5] sm:$0x1] %vm501, %v500
    // Predicated region
    $region46: #{tpu_custom_call.1} parent=1 // pred_check
      _
    $region47: #{tpu_custom_call.1} parent=1 // pred_check_branch
      %504 = sbr.rel (0) target = $region49
    $region48: #{tpu_custom_call.1} parent=1 // pred_region
      %s506 = ssub.s32 16, 16
      %507 = vsyncadd [#allocation6], %s506
      %s509 = sshll.u32 [#allocation5], 4
      %s510 = int_to_ptr.vmem [resolvable:$true] %s509
      %512 = dma.vmem_to_hbm [thread:$0]  %s510, 16, %s11, [#allocation6]
    $region49: #{tpu_custom_call.1} parent=1 // pred_fallthru
      _
    // Predicated region
    $region50: #{tpu_custom_call.1} parent=1 // pred_check
      _
    $region51: #{tpu_custom_call.1} parent=1 // pred_check_branch
      %514 = sbr.rel (0) target = $region53
    $region52: #{tpu_custom_call.1} parent=1 // pred_region
      %515 = dma.done [#allocation6], 16
    $region53: #{tpu_custom_call.1} parent=1 // pred_fallthru
      _
    %516 = vsyncpa [#allocation6], 1

</llo_original>
